<compile_context>
chip_gen: v7x
topology: tpu7x:2x2x1
jax: 0.10.0
libtpu: 0.0.40
codegen_flags: <defaults>
</compile_context>

<pallas_src>
import math

import jax
import jax.numpy as jnp
from jax.experimental import pallas as pl
from jax.experimental.pallas import tpu as pltpu

_LANE = 128
_ACC_ROWS = 32                      # accumulator sublane depth (breaks up the add chain)
_TARGET_STEP_BYTES = 8 * 1024 * 1024   # HBM bytes fetched per grid step (all streams)
_VMEM_LIMIT = 32 * 1024 * 1024
_SMALL_MAX_ELEMS = 32768            # tensors at/below this are packed into one slab


# ----------------------------------------------------------------------------
# Kernels
# ----------------------------------------------------------------------------

def _l2_tiled_kernel(p_ref, wd_ref, out_ref):
    """out_ref[0] += sum over tile of exp(wd) * p**2, grouped into (32,128).

    p_ref  : (tile_rows, 128) parameter tile (native dtype, widened in-kernel)
    wd_ref : (tile_rows, 128) log-space per-element weight decay tile
    out_ref: (1, 32, 128) f32 per-core accumulator, resident across the k axis.
    """
    @pl.when(pl.program_id(1) == 0)
    def _init():
        out_ref[...] = jnp.zeros_like(out_ref)

    p = p_ref[...].astype(jnp.float32)
    wd = wd_ref[...].astype(jnp.float32)
    # exp() goes to the EUP slot; muls to the VPU; both hidden under the HBM
    # window.  (If EUP ever binds on v7x, prefer the const-wd path below.)
    contrib = jnp.exp(wd) * (p * p)                          # (tile_rows, 128)
    out_ref[0] += contrib.reshape(-1, _ACC_ROWS, _LANE).sum(axis=0)   # (32, 128)


def _sumsq_tiled_kernel(p_ref, out_ref):
    """Const-weight-decay fast path: out_ref[0] += sum over tile of p**2.

    Only the parameter stream hits HBM; exp(log_wd) is applied outside.
    """
    @pl.when(pl.program_id(1) == 0)
    def _init():
        out_ref[...] = jnp.zeros_like(out_ref)

    p = p_ref[...].astype(jnp.float32)
    out_ref[0] += (p * p).reshape(-1, _ACC_ROWS, _LANE).sum(axis=0)


# ----------------------------------------------------------------------------
# Tiling helpers
# ----------------------------------------------------------------------------

def _ceil_div(a, b):
    return -(-a // b)


def _round_up(x, m):
    return _ceil_div(x, m) * m


def _num_tensorcores():
    """Defensive TensorCore-count query; 1 on single-TC chips / on failure."""
    try:
        info = pltpu.get_tpu_info()
    except Exception:
        info = None
    if info is not None:
        for name in ("num_tensorcores", "tensorcore_count", "num_cores",
                     "core_count", "cores_per_chip"):
            v = getattr(info, name, None)
            if isinstance(v, int) and 1 <= v <= 8:
                return v
    return 1


def _choose_tiling(n_elems, itemsizes):
    """Pick (tile_rows, k_tiles, split, rows_total) for a flat stream.

    tile_rows is a multiple of 32 (covers f32/bf16/int8 sublane alignment and
    the (32,128) accumulator reshape) and sized so that one grid step moves
    ~_TARGET_STEP_BYTES across all streams.
    """
    rows_needed = _ceil_div(max(int(n_elems), 1), _LANE)
    split = _num_tensorcores()
    if rows_needed < 4096 or split < 2:
        split = 1
    bytes_per_row = _LANE * max(1, sum(int(s) for s in itemsizes))
    max_tile_rows = max(_ACC_ROWS,
                        (_TARGET_STEP_BYTES // bytes_per_row) // _ACC_ROWS * _ACC_ROWS)
    rows_per_core = _ceil_div(rows_needed, split)
    tile_rows = min(max_tile_rows, _round_up(rows_per_core, _ACC_ROWS))
    k_tiles = _ceil_div(rows_per_core, tile_rows)
    rows_total = split * k_tiles * tile_rows
    return tile_rows, k_tiles, split, rows_total


# ----------------------------------------------------------------------------
# Per-stream partial sums (one pallas_call per slab)
# ----------------------------------------------------------------------------

def _l2_partial_slab(flat_p, flat_w):
    """sum(exp(flat_w) * flat_p**2) for one flat parameter/wd stream."""
    n = int(flat_p.shape[0])
    itemsizes = (jnp.dtype(flat_p.dtype).itemsize, jnp.dtype(flat_w.dtype).itemsize)
    tile_rows, k_tiles, split, rows_total = _choose_tiling(n, itemsizes)
    n_pad = rows_total * _LANE
    if n_pad != n:
        # Padded parameter elements are 0 -> contribute exp(wd)*0 = 0.
        flat_p = jnp.pad(flat_p, (0, n_pad - n))
        flat_w = jnp.pad(flat_w, (0, n_pad - n))
    p_slab = flat_p.reshape(rows_total, _LANE)   # contiguous reshape: no copy
    w_slab = flat_w.reshape(rows_total, _LANE)

    out = pl.pallas_call(
        _l2_tiled_kernel,
        out_shape=jax.ShapeDtypeStruct((split, _ACC_ROWS, _LANE), jnp.float32),
        grid_spec=pltpu.PrefetchScalarGridSpec(
            num_scalar_prefetch=0,
            grid=(split, k_tiles),
            in_specs=[
                pl.BlockSpec((tile_rows, _LANE),
                             lambda c, k, kt=k_tiles: (c * kt + k, 0)),
                pl.BlockSpec((tile_rows, _LANE),
                             lambda c, k, kt=k_tiles: (c * kt + k, 0)),
            ],
            out_specs=pl.BlockSpec((1, _ACC_ROWS, _LANE), lambda c, k: (c, 0, 0)),
        ),
        compiler_params=pltpu.CompilerParams(
            dimension_semantics=("parallel", "arbitrary"),
            vmem_limit_bytes=_VMEM_LIMIT,
        ),
    )(p_slab, w_slab)
    # Tiny final reduction (split * 32 * 128 floats) in plain JAX.
    return jnp.sum(out, dtype=jnp.float32)


def _sumsq_partial_slab(flat_p):
    """sum(flat_p**2) for one flat parameter stream (no wd stream at all)."""
    n = int(flat_p.shape[0])
    itemsizes = (jnp.dtype(flat_p.dtype).itemsize,)
    tile_rows, k_tiles, split, rows_total = _choose_tiling(n, itemsizes)
    n_pad = rows_total * _LANE
    if n_pad != n:
        flat_p = jnp.pad(flat_p, (0, n_pad - n))
    p_slab = flat_p.reshape(rows_total, _LANE)

    out = pl.pallas_call(
        _sumsq_tiled_kernel,
        out_shape=jax.ShapeDtypeStruct((split, _ACC_ROWS, _LANE), jnp.float32),
        grid_spec=pltpu.PrefetchScalarGridSpec(
            num_scalar_prefetch=0,
            grid=(split, k_tiles),
            in_specs=[
                pl.BlockSpec((tile_rows, _LANE),
                             lambda c, k, kt=k_tiles: (c * kt + k, 0)),
            ],
            out_specs=pl.BlockSpec((1, _ACC_ROWS, _LANE), lambda c, k: (c, 0, 0)),
        ),
        compiler_params=pltpu.CompilerParams(
            dimension_semantics=("parallel", "arbitrary"),
            vmem_limit_bytes=_VMEM_LIMIT,
        ),
    )(p_slab)
    return jnp.sum(out, dtype=jnp.float32)


# ----------------------------------------------------------------------------
# Hypernet loss entry points
# ----------------------------------------------------------------------------

def hypernet_all_l2_loss(params, weight_decays):
    """Pallas equivalent of Hypernet.all_L2_loss() with normalize_type='exp',
    reg_type='L2', weight_decay_type='per_param' (arbitrary per-element wd).

    Large tensors stream per-tensor in native dtype (no concat, no promotion);
    only small tensors are packed into one per-dtype slab to amortize dispatch.
    """
    if len(params) == 0:
        return jnp.float32(0.0)
    partials = []
    small = {}   # dtype -> ([p pieces], [wd pieces])
    for p, wd in zip(params, weight_decays):
        if int(p.size) > _SMALL_MAX_ELEMS:
            partials.append(_l2_partial_slab(jnp.ravel(p), jnp.ravel(wd)))
        else:
            key = jnp.dtype(p.dtype)
            if key not in small:
                small[key] = ([], [])
            small[key][0].append(jnp.ravel(p))
            small[key][1].append(jnp.ravel(wd).astype(jnp.float32))
    for _, (pp, ww) in small.items():
        partials.append(_l2_partial_slab(jnp.concatenate(pp), jnp.concatenate(ww)))
    total = partials[0]
    for x in partials[1:]:
        total = total + x
    return total


def hypernet_all_l2_loss_const_wd(params, log_weight_decays):
    """Fast path for the per_param *init* case: each weight_decay_i tensor is a
    per-tensor constant (full_like(p, log(wd_init))).  Large tensors stream only
    their parameter bytes; exp(log_wd) is applied in JAX on the scalar sumsq.
    Accepts Python floats or traced JAX scalars for log_weight_decays."""
    if len(params) == 0:
        return jnp.float32(0.0)
    partials = []
    small = {}   # dtype -> ([p pieces], [wd pieces])
    for p, lw in zip(params, log_weight_decays):
        lw_f = jnp.asarray(lw, dtype=jnp.float32)
        if int(p.size) > _SMALL_MAX_ELEMS:
            partials.append(jnp.exp(lw_f) * _sumsq_partial_slab(jnp.ravel(p)))
        else:
            key = jnp.dtype(p.dtype)
            if key not in small:
                small[key] = ([], [])
            small[key][0].append(jnp.ravel(p))
            small[key][1].append(jnp.full((int(p.size),), lw_f, dtype=jnp.float32))
    for _, (pp, ww) in small.items():
        partials.append(_l2_partial_slab(jnp.concatenate(pp), jnp.concatenate(ww)))
    total = partials[0]
    for x in partials[1:]:
        total = total + x
    return total


# ----------------------------------------------------------------------------
# Synthetic module setup + self-test
# ----------------------------------------------------------------------------

def make_synthetic_hypernet_params(key):
    """Deterministic stand-in for the backbone parameters a concrete Hypernet
    subclass would register (small conv + bn + one larger fc + classifier).
    The fc weight is bf16 to exercise native-dtype streaming and the large
    per-tensor tiled path."""
    shapes = {
        "conv1.weight": ((8, 4, 3, 3), jnp.float32),
        "conv1.bias": ((8,), jnp.float32),
        "bn1.weight": ((8,), jnp.float32),
        "bn1.bias": ((8,), jnp.float32),
        "fc.weight": ((256, 512), jnp.bfloat16),      # 131072 elems -> tiled path
        "classifier.weight": ((10, 8), jnp.float32),
        "classifier.bias": ((10,), jnp.float32),
    }
    params = []
    keys = jax.random.split(key, len(shapes))
    for k, (_, (shp, dt)) in zip(keys, shapes.items()):
        params.append(0.1 * jax.random.normal(k, shp, dtype=jnp.float32))
        params[-1] = params[-1].astype(dt)
    return shapes, params


def init_wdecay_per_param(params, weight_decay_init=0.0005):
    # normalize_type='exp' -> normalize_inv = math.log  (learnable wds are f32)
    wd_val = math.log(weight_decay_init)
    return [jnp.full(p.shape, wd_val, dtype=jnp.float32) for p in params]


if __name__ == "__main__":
    key = jax.random.PRNGKey(0)
    kimg, kparam = jax.random.split(key)

    # Example image input (forward itself is abstract in the reference module).
    img = jax.random.normal(kimg, (2, 4, 16, 16), dtype=jnp.float32)  # NCHW
    del img

    _, params = make_synthetic_hypernet_params(kparam)
    weight_decays = init_wdecay_per_param(params, weight_decay_init=0.0005)
    log_wds = [math.log(0.0005)] * len(params)

    # General per-param path (streams both params and the full wd tensors).
    loss = hypernet_all_l2_loss(params, weight_decays)
    loss = jax.block_until_ready(loss)

    # Constant-per-tensor fast path (parameter stream only for large tensors).
    loss_fast = hypernet_all_l2_loss_const_wd(params, log_wds)
    loss_fast = jax.block_until_ready(loss_fast)

    # Pure-JAX reference of all_L2_loss
    ref = jnp.float32(0.0)
    for p, wd in zip(params, weight_decays):
        ref = ref + jnp.sum(jnp.exp(wd) * p.astype(jnp.float32) ** 2)
    ref = jax.block_until_ready(ref)

    assert jnp.allclose(loss, ref, rtol=1e-5, atol=1e-6), (loss, ref)
    assert jnp.allclose(loss_fast, ref, rtol=1e-5, atol=1e-6), (loss_fast, ref)
    print("KERNEL_OK")
</pallas_src>

<mosaic_0001>
module attributes {stable_mosaic.version = 11 : i64} {
  func.func @_l2_tiled_kernel(%arg0: i32, %arg1: i32, %arg2: memref<1024x128xbf16, #tpu.memory_space<vmem>>, %arg3: memref<1024x128xf32, #tpu.memory_space<vmem>>, %arg4: memref<1x32x128xf32, #tpu.memory_space<vmem>>) attributes {dimension_semantics = [#tpu.dimension_semantics<parallel>, #tpu.dimension_semantics<arbitrary>], iteration_bounds = array<i64: 1, 1>, scalar_prefetch = 0 : i64, scratch_operands = 0 : i64, tpu.core_type = #tpu.core_type<tc>, window_params = [{transform_indices = @transform_0, window_bounds = array<i64: 1024, 128>}, {transform_indices = @transform_1, window_bounds = array<i64: 1024, 128>}, {transform_indices = @transform_2, window_bounds = array<i64: 1, 32, 128>}]} {
    %c0_i32 = arith.constant 0 : i32
    %0 = arith.cmpi eq, %arg1, %c0_i32 : i32
    %1 = arith.extui %0 : i1 to i32
    %c0_i32_0 = arith.constant 0 : i32
    %2 = arith.cmpi ne, %1, %c0_i32_0 : i32
    scf.if %2 {
      %cst_10 = arith.constant 0.000000e+00 : f32
      %17 = vector.broadcast %cst_10 : f32 to vector<1x32x128xf32>
      %c0_11 = arith.constant 0 : index
      %c0_12 = arith.constant 0 : index
      %c0_13 = arith.constant 0 : index
      %18 = vector.load %arg4[%c0_11, %c0_12, %c0_13] : memref<1x32x128xf32, #tpu.memory_space<vmem>>, vector<1x32x128xf32>
      tpu.vector_store %arg4[%c0_11, %c0_12, %c0_13], %17 {strides = array<i32>} : memref<1x32x128xf32, #tpu.memory_space<vmem>>, vector<1x32x128xf32>,
    } else {
    }
    %c0 = arith.constant 0 : index
    %c0_1 = arith.constant 0 : index
    %3 = vector.load %arg2[%c0, %c0_1] : memref<1024x128xbf16, #tpu.memory_space<vmem>>, vector<1024x128xbf16>
    %4 = arith.extf %3 : vector<1024x128xbf16> to vector<1024x128xf32>
    %c0_2 = arith.constant 0 : index
    %c0_3 = arith.constant 0 : index
    %5 = vector.load %arg3[%c0_2, %c0_3] : memref<1024x128xf32, #tpu.memory_space<vmem>>, vector<1024x128xf32>
    %6 = math.exp %5 : vector<1024x128xf32>
    %7 = arith.mulf %4, %4 : vector<1024x128xf32>
    %8 = arith.mulf %6, %7 : vector<1024x128xf32>
    %c0_4 = arith.constant 0 : index
    %c0_5 = arith.constant 0 : index
    %c0_6 = arith.constant 0 : index
    %9 = vector.load %arg4[%c0_4, %c0_5, %c0_6] : memref<1x32x128xf32, #tpu.memory_space<vmem>>, vector<1x32x128xf32>
    %10 = vector.shape_cast %9 : vector<1x32x128xf32> to vector<32x128xf32>
    %11 = vector.shape_cast %8 : vector<1024x128xf32> to vector<32x32x128xf32>
    %cst = arith.constant dense<0.000000e+00> : vector<32x128xf32>
    %12 = vector.multi_reduction <add>, %11, %cst [0] : vector<32x32x128xf32> to vector<32x128xf32>
    %13 = arith.addf %10, %12 : vector<32x128xf32>
    %c0_7 = arith.constant 0 : index
    %c0_8 = arith.constant 0 : index
    %c0_9 = arith.constant 0 : index
    %14 = vector.load %arg4[%c0_7, %c0_8, %c0_9] : memref<1x32x128xf32, #tpu.memory_space<vmem>>, vector<1x32x128xf32>
    %15 = vector.shape_cast %14 : vector<1x32x128xf32> to vector<32x128xf32>
    %16 = vector.shape_cast %13 : vector<32x128xf32> to vector<1x32x128xf32>
    tpu.vector_store %arg4[%c0_7, %c0_8, %c0_9], %16 {strides = array<i32>} : memref<1x32x128xf32, #tpu.memory_space<vmem>>, vector<1x32x128xf32>,
    return
  }
  func.func @transform_0(%arg0: i32, %arg1: i32) -> (i32, i32) {
    %c1_i32 = arith.constant 1 : i32
    %0 = arith.muli %arg0, %c1_i32 : i32
    %1 = arith.addi %0, %arg1 : i32
    %c0_i32 = arith.constant 0 : i32
    %c0_i32_0 = arith.constant 0 : i32
    return %1, %c0_i32 : i32, i32
  }
  func.func @transform_1(%arg0: i32, %arg1: i32) -> (i32, i32) {
    %c1_i32 = arith.constant 1 : i32
    %0 = arith.muli %arg0, %c1_i32 : i32
    %1 = arith.addi %0, %arg1 : i32
    %c0_i32 = arith.constant 0 : i32
    %c0_i32_0 = arith.constant 0 : i32
    return %1, %c0_i32 : i32, i32
  }
  func.func @transform_2(%arg0: i32, %arg1: i32) -> (i32, i32, i32) {
    %c0_i32 = arith.constant 0 : i32
    %c0_i32_0 = arith.constant 0 : i32
    %c0_i32_1 = arith.constant 0 : i32
    return %arg0, %c0_i32, %c0_i32_0 : i32, i32, i32
  }
}

</mosaic_0001>

<llo_original>
// kernel: tpu_custom_call.1
$region0: #{tpu_custom_call.1}
  #allocation0 [shape = 'u32[]', space=smem, size = 0x4, offset = 0x4, fixed_abs, tag = 'smem constant byte address 0x4 - core index']
  #allocation1 [shape = 'u32[144,128]{1,0:T(1,128)}', space=vmem, size = 0x12000, scoped, tag = 'internal scratch']
  %s0 = inlined_call_operand.hbm [shape: bf16[1024,128], index: 0, kind: input, shape index: {}]
  %s1 = inlined_call_operand.hbm [shape: f32[1024,128], index: 1, kind: input, shape index: {}]
  %s2 = inlined_call_operand.hbm [shape: f32[1,32,128], index: 2, kind: output, shape index: {}]
  %s3 = sld [smem:[#allocation0]]
  $region30: #{tpu_custom_call.1} parent=0
    _
  %s5 = ssub.s32 1, %s3
  %s6 = scalar_select 0, %s5, %s3
  $region1: #{tpu_custom_call.1} parent=0
    #allocation2 [shape = 'u8[262144]{0}', space=vmem, size = 0x40000, scoped, tag = 'input window, operand 0, single buffered']
    #allocation3 [shape = 's32[1]{0}', space=sflag, size = 0x4, scoped, tag = 'scoped memory for tpu_custom_call.1']
    #allocation4 [shape = 's32[1]{0}', space=sflag, size = 0x4, scoped, tag = 'scoped memory for tpu_custom_call.1']
    #allocation5 [shape = 'u8[524288]{0}', space=vmem, size = 0x80000, scoped, tag = 'input window, operand 1, single buffered']
    #allocation6 [shape = 's32[1]{0}', space=sflag, size = 0x4, scoped, tag = 'scoped memory for tpu_custom_call.1']
    #allocation7 [shape = 'u8[16384]{0}', space=vmem, size = 0x4000, scoped, tag = 'output window, operand 0, single buffered']
    %7 = vsyncpa [#allocation3], 0
    %8 = vsyncpa [#allocation6], 0
    %9 = vsyncpa [#allocation4], 0
    // Predicated region
    $region2: #{tpu_custom_call.1} parent=1 // pred_check
      _
    $region3: #{tpu_custom_call.1} parent=1 // pred_check_branch
      %11 = sbr.rel (0) target = $region5
    $region4: #{tpu_custom_call.1} parent=1 // pred_region
      %s12 = sadd.s32 0, 0
      %s13 = smul.u32 128, %s12
      %s15 = ssub.s32 8192, 8192
      %16 = vsyncadd [#allocation3], %s15
      %s17 = smul.addr %s13, 64
      %s18 = scalar_lea.hbm %s0, %s17
      %s19 = sshll.u32 [#allocation2], 4
      %s20 = int_to_ptr.vmem [resolvable:$true] %s19
      %25 = dma.hbm_to_vmem [thread:$0]  %s18, 8192, %s20, [#allocation3], 64, 64, 4
    $region5: #{tpu_custom_call.1} parent=1 // pred_fallthru
      _
    // Predicated region
    $region6: #{tpu_custom_call.1} parent=1 // pred_check
      _
    $region7: #{tpu_custom_call.1} parent=1 // pred_check_branch
      %27 = sbr.rel (0) target = $region9
    $region8: #{tpu_custom_call.1} parent=1 // pred_region
      %s28 = sadd.s32 0, 0
      %s29 = smul.u32 128, %s28
      %s31 = ssub.s32 16384, 16384
      %32 = vsyncadd [#allocation6], %s31
      %s33 = smul.addr %s29, 128
      %s34 = scalar_lea.hbm %s1, %s33
      %s35 = sshll.u32 [#allocation5], 4
      %s36 = int_to_ptr.vmem [resolvable:$true] %s35
      %41 = dma.hbm_to_vmem [thread:$0]  %s34, 16384, %s36, [#allocation6], 128, 128, 8
    $region9: #{tpu_custom_call.1} parent=1 // pred_fallthru
      _
    // Predicated region
    $region10: #{tpu_custom_call.1} parent=1 // pred_check
      _
    $region11: #{tpu_custom_call.1} parent=1 // pred_check_branch
      %43 = sbr.rel (0) target = $region13
    $region12: #{tpu_custom_call.1} parent=1 // pred_region
      %44 = dma.done [#allocation3], 8192
    $region13: #{tpu_custom_call.1} parent=1 // pred_fallthru
      _
    // Predicated region
    $region14: #{tpu_custom_call.1} parent=1 // pred_check
      _
    $region15: #{tpu_custom_call.1} parent=1 // pred_check_branch
      %46 = sbr.rel (0) target = $region17
    $region16: #{tpu_custom_call.1} parent=1 // pred_region
      %47 = dma.done [#allocation6], 16384
    $region17: #{tpu_custom_call.1} parent=1 // pred_fallthru
      _
    %s48 = sadd.s32 0, 0
    %s49 = smul.u32 128, %s48
    %s50 = sadd.s32 0, 0
    %s51 = smul.u32 128, %s50
    %p52 = scmp.eq.s32.totalorder 0, 0
    // Predicated region
    $region18: #{tpu_custom_call.1} parent=1 // pred_check
      %p53 = pneg %p52
    $region19: #{tpu_custom_call.1} parent=1 // pred_check_branch
      %55 = sbr.rel (%p53) target = $region21
    $region20: #{tpu_custom_call.1} parent=1 // pred_region
      %56 = vst [vmem:[#allocation7] sm:$0xff] 0.0
      %57 = vst [vmem:[#allocation7 + $0x8] sm:$0xff] 0.0
      %58 = vst [vmem:[#allocation7 + $0x10] sm:$0xff] 0.0
      %59 = vst [vmem:[#allocation7 + $0x18] sm:$0xff] 0.0
    $region21: #{tpu_custom_call.1} parent=1 // pred_fallthru
      _
    %v60 = vld [vmem:[#allocation2] sm:$0xf]
    %v61 = vld [vmem:[#allocation2 + $0x4] sm:$0xf]
    %v62 = vld [vmem:[#allocation2 + $0x8] sm:$0xf]
    %v63 = vld [vmem:[#allocation2 + $0xc] sm:$0xf]
    %v64 = vld [vmem:[#allocation2 + $0x10] sm:$0xf]
    %v65 = vld [vmem:[#allocation2 + $0x14] sm:$0xf]
    %v66 = vld [vmem:[#allocation2 + $0x18] sm:$0xf]
    %v67 = vld [vmem:[#allocation2 + $0x1c] sm:$0xf]
    %v68 = vld [vmem:[#allocation2 + $0x20] sm:$0xf]
    %v69 = vld [vmem:[#allocation2 + $0x24] sm:$0xf]
    %v70 = vld [vmem:[#allocation2 + $0x28] sm:$0xf]
    %v71 = vld [vmem:[#allocation2 + $0x2c] sm:$0xf]
    %v72 = vld [vmem:[#allocation2 + $0x30] sm:$0xf]
    %v73 = vld [vmem:[#allocation2 + $0x34] sm:$0xf]
    %v74 = vld [vmem:[#allocation2 + $0x38] sm:$0xf]
    %v75 = vld [vmem:[#allocation2 + $0x3c] sm:$0xf]
    %v76 = vld [vmem:[#allocation2 + $0x40] sm:$0xf]
    %v77 = vld [vmem:[#allocation2 + $0x44] sm:$0xf]
    %v78 = vld [vmem:[#allocation2 + $0x48] sm:$0xf]
    %v79 = vld [vmem:[#allocation2 + $0x4c] sm:$0xf]
    %v80 = vld [vmem:[#allocation2 + $0x50] sm:$0xf]
    %v81 = vld [vmem:[#allocation2 + $0x54] sm:$0xf]
    %v82 = vld [vmem:[#allocation2 + $0x58] sm:$0xf]
    %v83 = vld [vmem:[#allocation2 + $0x5c] sm:$0xf]
    %v84 = vld [vmem:[#allocation2 + $0x60] sm:$0xf]
    %v85 = vld [vmem:[#allocation2 + $0x64] sm:$0xf]
    %v86 = vld [vmem:[#allocation2 + $0x68] sm:$0xf]
    %v87 = vld [vmem:[#allocation2 + $0x6c] sm:$0xf]
    %v88 = vld [vmem:[#allocation2 + $0x70] sm:$0xf]
    %v89 = vld [vmem:[#allocation2 + $0x74] sm:$0xf]
    %v90 = vld [vmem:[#allocation2 + $0x78] sm:$0xf]
    %v91 = vld [vmem:[#allocation2 + $0x7c] sm:$0xf]
    %v92 = vld [vmem:[#allocation2 + $0x80] sm:$0xf]
    %v93 = vld [vmem:[#allocation2 + $0x84] sm:$0xf]
    %v94 = vld [vmem:[#allocation2 + $0x88] sm:$0xf]
    %v95 = vld [vmem:[#allocation2 + $0x8c] sm:$0xf]
    %v96 = vld [vmem:[#allocation2 + $0x90] sm:$0xf]
    %v97 = vld [vmem:[#allocation2 + $0x94] sm:$0xf]
    %v98 = vld [vmem:[#allocation2 + $0x98] sm:$0xf]
    %v99 = vld [vmem:[#allocation2 + $0x9c] sm:$0xf]
    %v100 = vld [vmem:[#allocation2 + $0xa0] sm:$0xf]
    %v101 = vld [vmem:[#allocation2 + $0xa4] sm:$0xf]
    %v102 = vld [vmem:[#allocation2 + $0xa8] sm:$0xf]
    %v103 = vld [vmem:[#allocation2 + $0xac] sm:$0xf]
    %v104 = vld [vmem:[#allocation2 + $0xb0] sm:$0xf]
    %v105 = vld [vmem:[#allocation2 + $0xb4] sm:$0xf]
    %v106 = vld [vmem:[#allocation2 + $0xb8] sm:$0xf]
    %v107 = vld [vmem:[#allocation2 + $0xbc] sm:$0xf]
    %v108 = vld [vmem:[#allocation2 + $0xc0] sm:$0xf]
    %v109 = vld [vmem:[#allocation2 + $0xc4] sm:$0xf]
    %v110 = vld [vmem:[#allocation2 + $0xc8] sm:$0xf]
    %v111 = vld [vmem:[#allocation2 + $0xcc] sm:$0xf]
    %v112 = vld [vmem:[#allocation2 + $0xd0] sm:$0xf]
    %v113 = vld [vmem:[#allocation2 + $0xd4] sm:$0xf]
    %v114 = vld [vmem:[#allocation2 + $0xd8] sm:$0xf]
    %v115 = vld [vmem:[#allocation2 + $0xdc] sm:$0xf]
    %v116 = vld [vmem:[#allocation2 + $0xe0] sm:$0xf]
    %v117 = vld [vmem:[#allocation2 + $0xe4] sm:$0xf]
    %v118 = vld [vmem:[#allocation2 + $0xe8] sm:$0xf]
    %v119 = vld [vmem:[#allocation2 + $0xec] sm:$0xf]
    %v120 = vld [vmem:[#allocation2 + $0xf0] sm:$0xf]
    %v121 = vld [vmem:[#allocation2 + $0xf4] sm:$0xf]
    %v122 = vld [vmem:[#allocation2 + $0xf8] sm:$0xf]
    %v123 = vld [vmem:[#allocation2 + $0xfc] sm:$0xf]
    %v124 = vld [vmem:[#allocation2 + $0x100] sm:$0xf]
    %v125 = vld [vmem:[#allocation2 + $0x104] sm:$0xf]
    %v126 = vld [vmem:[#allocation2 + $0x108] sm:$0xf]
    %v127 = vld [vmem:[#allocation2 + $0x10c] sm:$0xf]
    %v128 = vld [vmem:[#allocation2 + $0x110] sm:$0xf]
    %v129 = vld [vmem:[#allocation2 + $0x114] sm:$0xf]
    %v130 = vld [vmem:[#allocation2 + $0x118] sm:$0xf]
    %v131 = vld [vmem:[#allocation2 + $0x11c] sm:$0xf]
    %v132 = vld [vmem:[#allocation2 + $0x120] sm:$0xf]
    %v133 = vld [vmem:[#allocation2 + $0x124] sm:$0xf]
    %v134 = vld [vmem:[#allocation2 + $0x128] sm:$0xf]
    %v135 = vld [vmem:[#allocation2 + $0x12c] sm:$0xf]
    %v136 = vld [vmem:[#allocation2 + $0x130] sm:$0xf]
    %v137 = vld [vmem:[#allocation2 + $0x134] sm:$0xf]
    %v138 = vld [vmem:[#allocation2 + $0x138] sm:$0xf]
    %v139 = vld [vmem:[#allocation2 + $0x13c] sm:$0xf]
    %v140 = vld [vmem:[#allocation2 + $0x140] sm:$0xf]
    %v141 = vld [vmem:[#allocation2 + $0x144] sm:$0xf]
    %v142 = vld [vmem:[#allocation2 + $0x148] sm:$0xf]
    %v143 = vld [vmem:[#allocation2 + $0x14c] sm:$0xf]
    %v144 = vld [vmem:[#allocation2 + $0x150] sm:$0xf]
    %v145 = vld [vmem:[#allocation2 + $0x154] sm:$0xf]
    %v146 = vld [vmem:[#allocation2 + $0x158] sm:$0xf]
    %v147 = vld [vmem:[#allocation2 + $0x15c] sm:$0xf]
    %v148 = vld [vmem:[#allocation2 + $0x160] sm:$0xf]
    %v149 = vld [vmem:[#allocation2 + $0x164] sm:$0xf]
    %v150 = vld [vmem:[#allocation2 + $0x168] sm:$0xf]
    %v151 = vld [vmem:[#allocation2 + $0x16c] sm:$0xf]
    %v152 = vld [vmem:[#allocation2 + $0x170] sm:$0xf]
    %v153 = vld [vmem:[#allocation2 + $0x174] sm:$0xf]
    %v154 = vld [vmem:[#allocation2 + $0x178] sm:$0xf]
    %v155 = vld [vmem:[#allocation2 + $0x17c] sm:$0xf]
    %v156 = vld [vmem:[#allocation2 + $0x180] sm:$0xf]
    %v157 = vld [vmem:[#allocation2 + $0x184] sm:$0xf]
    %v158 = vld [vmem:[#allocation2 + $0x188] sm:$0xf]
    %v159 = vld [vmem:[#allocation2 + $0x18c] sm:$0xf]
    %v160 = vld [vmem:[#allocation2 + $0x190] sm:$0xf]
    %v161 = vld [vmem:[#allocation2 + $0x194] sm:$0xf]
    %v162 = vld [vmem:[#allocation2 + $0x198] sm:$0xf]
    %v163 = vld [vmem:[#allocation2 + $0x19c] sm:$0xf]
    %v164 = vld [vmem:[#allocation2 + $0x1a0] sm:$0xf]
    %v165 = vld [vmem:[#allocation2 + $0x1a4] sm:$0xf]
    %v166 = vld [vmem:[#allocation2 + $0x1a8] sm:$0xf]
    %v167 = vld [vmem:[#allocation2 + $0x1ac] sm:$0xf]
    %v168 = vld [vmem:[#allocation2 + $0x1b0] sm:$0xf]
    %v169 = vld [vmem:[#allocation2 + $0x1b4] sm:$0xf]
    %v170 = vld [vmem:[#allocation2 + $0x1b8] sm:$0xf]
    %v171 = vld [vmem:[#allocation2 + $0x1bc] sm:$0xf]
    %v172 = vld [vmem:[#allocation2 + $0x1c0] sm:$0xf]
    %v173 = vld [vmem:[#allocation2 + $0x1c4] sm:$0xf]
    %v174 = vld [vmem:[#allocation2 + $0x1c8] sm:$0xf]
    %v175 = vld [vmem:[#allocation2 + $0x1cc] sm:$0xf]
    %v176 = vld [vmem:[#allocation2 + $0x1d0] sm:$0xf]
    %v177 = vld [vmem:[#allocation2 + $0x1d4] sm:$0xf]
    %v178 = vld [vmem:[#allocation2 + $0x1d8] sm:$0xf]
    %v179 = vld [vmem:[#allocation2 + $0x1dc] sm:$0xf]
    %v180 = vld [vmem:[#allocation2 + $0x1e0] sm:$0xf]
    %v181 = vld [vmem:[#allocation2 + $0x1e4] sm:$0xf]
    %v182 = vld [vmem:[#allocation2 + $0x1e8] sm:$0xf]
    %v183 = vld [vmem:[#allocation2 + $0x1ec] sm:$0xf]
    %v184 = vld [vmem:[#allocation2 + $0x1f0] sm:$0xf]
    %v185 = vld [vmem:[#allocation2 + $0x1f4] sm:$0xf]
    %v186 = vld [vmem:[#allocation2 + $0x1f8] sm:$0xf]
    %v187 = vld [vmem:[#allocation2 + $0x1fc] sm:$0xf]
    %v188 = vunpack.c.l.bf16 %v60
    %v189 = vunpack.c.l.bf16 %v61
    %v190 = vunpack.c.l.bf16 %v62
    %v191 = vunpack.c.l.bf16 %v63
    %v192 = vunpack.c.l.bf16 %v64
    %v193 = vunpack.c.l.bf16 %v65
    %v194 = vunpack.c.l.bf16 %v66
    %v195 = vunpack.c.l.bf16 %v67
    %v196 = vunpack.c.l.bf16 %v68
    %v197 = vunpack.c.l.bf16 %v69
    %v198 = vunpack.c.l.bf16 %v70
    %v199 = vunpack.c.l.bf16 %v71
    %v200 = vunpack.c.l.bf16 %v72
    %v201 = vunpack.c.l.bf16 %v73
    %v202 = vunpack.c.l.bf16 %v74
    %v203 = vunpack.c.l.bf16 %v75
    %v204 = vunpack.c.l.bf16 %v76
    %v205 = vunpack.c.l.bf16 %v77
    %v206 = vunpack.c.l.bf16 %v78
    %v207 = vunpack.c.l.bf16 %v79
    %v208 = vunpack.c.l.bf16 %v80
    %v209 = vunpack.c.l.bf16 %v81
    %v210 = vunpack.c.l.bf16 %v82
    %v211 = vunpack.c.l.bf16 %v83
    %v212 = vunpack.c.l.bf16 %v84
    %v213 = vunpack.c.l.bf16 %v85
    %v214 = vunpack.c.l.bf16 %v86
    %v215 = vunpack.c.l.bf16 %v87
    %v216 = vunpack.c.l.bf16 %v88
    %v217 = vunpack.c.l.bf16 %v89
    %v218 = vunpack.c.l.bf16 %v90
    %v219 = vunpack.c.l.bf16 %v91
    %v220 = vunpack.c.l.bf16 %v92
    %v221 = vunpack.c.l.bf16 %v93
    %v222 = vunpack.c.l.bf16 %v94
    %v223 = vunpack.c.l.bf16 %v95
    %v224 = vunpack.c.l.bf16 %v96
    %v225 = vunpack.c.l.bf16 %v97
    %v226 = vunpack.c.l.bf16 %v98
    %v227 = vunpack.c.l.bf16 %v99
    %v228 = vunpack.c.l.bf16 %v100
    %v229 = vunpack.c.l.bf16 %v101
    %v230 = vunpack.c.l.bf16 %v102
    %v231 = vunpack.c.l.bf16 %v103
    %v232 = vunpack.c.l.bf16 %v104
    %v233 = vunpack.c.l.bf16 %v105
    %v234 = vunpack.c.l.bf16 %v106
    %v235 = vunpack.c.l.bf16 %v107
    %v236 = vunpack.c.l.bf16 %v108
    %v237 = vunpack.c.l.bf16 %v109
    %v238 = vunpack.c.l.bf16 %v110
    %v239 = vunpack.c.l.bf16 %v111
    %v240 = vunpack.c.l.bf16 %v112
    %v241 = vunpack.c.l.bf16 %v113
    %v242 = vunpack.c.l.bf16 %v114
    %v243 = vunpack.c.l.bf16 %v115
    %v244 = vunpack.c.l.bf16 %v116
    %v245 = vunpack.c.l.bf16 %v117
    %v246 = vunpack.c.l.bf16 %v118
    %v247 = vunpack.c.l.bf16 %v119
    %v248 = vunpack.c.l.bf16 %v120
    %v249 = vunpack.c.l.bf16 %v121
    %v250 = vunpack.c.l.bf16 %v122
    %v251 = vunpack.c.l.bf16 %v123
    %v252 = vunpack.c.l.bf16 %v124
    %v253 = vunpack.c.l.bf16 %v125
    %v254 = vunpack.c.l.bf16 %v126
    %v255 = vunpack.c.l.bf16 %v127
    %v256 = vunpack.c.l.bf16 %v128
    %v257 = vunpack.c.l.bf16 %v129
    %v258 = vunpack.c.l.bf16 %v130
    %v259 = vunpack.c.l.bf16 %v131
    %v260 = vunpack.c.l.bf16 %v132
    %v261 = vunpack.c.l.bf16 %v133
    %v262 = vunpack.c.l.bf16 %v134
    %v263 = vunpack.c.l.bf16 %v135
    %v264 = vunpack.c.l.bf16 %v136
    %v265 = vunpack.c.l.bf16 %v137
    %v266 = vunpack.c.l.bf16 %v138
    %v267 = vunpack.c.l.bf16 %v139
    %v268 = vunpack.c.l.bf16 %v140
    %v269 = vunpack.c.l.bf16 %v141
    %v270 = vunpack.c.l.bf16 %v142
    %v271 = vunpack.c.l.bf16 %v143
    %v272 = vunpack.c.l.bf16 %v144
    %v273 = vunpack.c.l.bf16 %v145
    %v274 = vunpack.c.l.bf16 %v146
    %v275 = vunpack.c.l.bf16 %v147
    %v276 = vunpack.c.l.bf16 %v148
    %v277 = vunpack.c.l.bf16 %v149
    %v278 = vunpack.c.l.bf16 %v150
    %v279 = vunpack.c.l.bf16 %v151
    %v280 = vunpack.c.l.bf16 %v152
    %v281 = vunpack.c.l.bf16 %v153
    %v282 = vunpack.c.l.bf16 %v154
    %v283 = vunpack.c.l.bf16 %v155
    %v284 = vunpack.c.l.bf16 %v156
    %v285 = vunpack.c.l.bf16 %v157
    %v286 = vunpack.c.l.bf16 %v158
    %v287 = vunpack.c.l.bf16 %v159
    %v288 = vunpack.c.l.bf16 %v160
    %v289 = vunpack.c.l.bf16 %v161
    %v290 = vunpack.c.l.bf16 %v162
    %v291 = vunpack.c.l.bf16 %v163
    %v292 = vunpack.c.l.bf16 %v164
    %v293 = vunpack.c.l.bf16 %v165
    %v294 = vunpack.c.l.bf16 %v166
    %v295 = vunpack.c.l.bf16 %v167
    %v296 = vunpack.c.l.bf16 %v168
    %v297 = vunpack.c.l.bf16 %v169
    %v298 = vunpack.c.l.bf16 %v170
    %v299 = vunpack.c.l.bf16 %v171
    %v300 = vunpack.c.l.bf16 %v172
    %v301 = vunpack.c.l.bf16 %v173
    %v302 = vunpack.c.l.bf16 %v174
    %v303 = vunpack.c.l.bf16 %v175
    %v304 = vunpack.c.l.bf16 %v176
    %v305 = vunpack.c.l.bf16 %v177
    %v306 = vunpack.c.l.bf16 %v178
    %v307 = vunpack.c.l.bf16 %v179
    %v308 = vunpack.c.l.bf16 %v180
    %v309 = vunpack.c.l.bf16 %v181
    %v310 = vunpack.c.l.bf16 %v182
    %v311 = vunpack.c.l.bf16 %v183
    %v312 = vunpack.c.l.bf16 %v184
    %v313 = vunpack.c.l.bf16 %v185
    %v314 = vunpack.c.l.bf16 %v186
    %v315 = vunpack.c.l.bf16 %v187
    %v316 = vld [vmem:[#allocation5] sm:$0xff]
    %v317 = vld [vmem:[#allocation5 + $0x8] sm:$0xff]
    %v318 = vld [vmem:[#allocation5 + $0x10] sm:$0xff]
    %v319 = vld [vmem:[#allocation5 + $0x18] sm:$0xff]
    %v320 = vld [vmem:[#allocation5 + $0x20] sm:$0xff]
    %v321 = vld [vmem:[#allocation5 + $0x28] sm:$0xff]
    %v322 = vld [vmem:[#allocation5 + $0x30] sm:$0xff]
    %v323 = vld [vmem:[#allocation5 + $0x38] sm:$0xff]
    %v324 = vld [vmem:[#allocation5 + $0x40] sm:$0xff]
    %v325 = vld [vmem:[#allocation5 + $0x48] sm:$0xff]
    %v326 = vld [vmem:[#allocation5 + $0x50] sm:$0xff]
    %v327 = vld [vmem:[#allocation5 + $0x58] sm:$0xff]
    %v328 = vld [vmem:[#allocation5 + $0x60] sm:$0xff]
    %v329 = vld [vmem:[#allocation5 + $0x68] sm:$0xff]
    %v330 = vld [vmem:[#allocation5 + $0x70] sm:$0xff]
    %v331 = vld [vmem:[#allocation5 + $0x78] sm:$0xff]
    %v332 = vld [vmem:[#allocation5 + $0x80] sm:$0xff]
    %v333 = vld [vmem:[#allocation5 + $0x88] sm:$0xff]
    %v334 = vld [vmem:[#allocation5 + $0x90] sm:$0xff]
    %v335 = vld [vmem:[#allocation5 + $0x98] sm:$0xff]
    %v336 = vld [vmem:[#allocation5 + $0xa0] sm:$0xff]
    %v337 = vld [vmem:[#allocation5 + $0xa8] sm:$0xff]
    %v338 = vld [vmem:[#allocation5 + $0xb0] sm:$0xff]
    %v339 = vld [vmem:[#allocation5 + $0xb8] sm:$0xff]
    %v340 = vld [vmem:[#allocation5 + $0xc0] sm:$0xff]
    %v341 = vld [vmem:[#allocation5 + $0xc8] sm:$0xff]
    %v342 = vld [vmem:[#allocation5 + $0xd0] sm:$0xff]
    %v343 = vld [vmem:[#allocation5 + $0xd8] sm:$0xff]
    %v344 = vld [vmem:[#allocation5 + $0xe0] sm:$0xff]
    %v345 = vld [vmem:[#allocation5 + $0xe8] sm:$0xff]
    %v346 = vld [vmem:[#allocation5 + $0xf0] sm:$0xff]
    %v347 = vld [vmem:[#allocation5 + $0xf8] sm:$0xff]
    %v348 = vld [vmem:[#allocation5 + $0x100] sm:$0xff]
    %v349 = vld [vmem:[#allocation5 + $0x108] sm:$0xff]
    %v350 = vld [vmem:[#allocation5 + $0x110] sm:$0xff]
    %v351 = vld [vmem:[#allocation5 + $0x118] sm:$0xff]
    %v352 = vld [vmem:[#allocation5 + $0x120] sm:$0xff]
    %v353 = vld [vmem:[#allocation5 + $0x128] sm:$0xff]
    %v354 = vld [vmem:[#allocation5 + $0x130] sm:$0xff]
    %v355 = vld [vmem:[#allocation5 + $0x138] sm:$0xff]
    %v356 = vld [vmem:[#allocation5 + $0x140] sm:$0xff]
    %v357 = vld [vmem:[#allocation5 + $0x148] sm:$0xff]
    %v358 = vld [vmem:[#allocation5 + $0x150] sm:$0xff]
    %v359 = vld [vmem:[#allocation5 + $0x158] sm:$0xff]
    %v360 = vld [vmem:[#allocation5 + $0x160] sm:$0xff]
    %v361 = vld [vmem:[#allocation5 + $0x168] sm:$0xff]
    %v362 = vld [vmem:[#allocation5 + $0x170] sm:$0xff]
    %v363 = vld [vmem:[#allocation5 + $0x178] sm:$0xff]
    %v364 = vld [vmem:[#allocation5 + $0x180] sm:$0xff]
    %v365 = vld [vmem:[#allocation5 + $0x188] sm:$0xff]
    %v366 = vld [vmem:[#allocation5 + $0x190] sm:$0xff]
    %v367 = vld [vmem:[#allocation5 + $0x198] sm:$0xff]
    %v368 = vld [vmem:[#allocation5 + $0x1a0] sm:$0xff]
    %v369 = vld [vmem:[#allocation5 + $0x1a8] sm:$0xff]
    %v370 = vld [vmem:[#allocation5 + $0x1b0] sm:$0xff]
    %v371 = vld [vmem:[#allocation5 + $0x1b8] sm:$0xff]
    %v372 = vld [vmem:[#allocation5 + $0x1c0] sm:$0xff]
    %v373 = vld [vmem:[#allocation5 + $0x1c8] sm:$0xff]
    %v374 = vld [vmem:[#allocation5 + $0x1d0] sm:$0xff]
    %v375 = vld [vmem:[#allocation5 + $0x1d8] sm:$0xff]
    %v376 = vld [vmem:[#allocation5 + $0x1e0] sm:$0xff]
    %v377 = vld [vmem:[#allocation5 + $0x1e8] sm:$0xff]
    %v378 = vld [vmem:[#allocation5 + $0x1f0] sm:$0xff]
    %v379 = vld [vmem:[#allocation5 + $0x1f8] sm:$0xff]
    %v380 = vld [vmem:[#allocation5 + $0x200] sm:$0xff]
    %v381 = vld [vmem:[#allocation5 + $0x208] sm:$0xff]
    %v382 = vld [vmem:[#allocation5 + $0x210] sm:$0xff]
    %v383 = vld [vmem:[#allocation5 + $0x218] sm:$0xff]
    %v384 = vld [vmem:[#allocation5 + $0x220] sm:$0xff]
    %v385 = vld [vmem:[#allocation5 + $0x228] sm:$0xff]
    %v386 = vld [vmem:[#allocation5 + $0x230] sm:$0xff]
    %v387 = vld [vmem:[#allocation5 + $0x238] sm:$0xff]
    %v388 = vld [vmem:[#allocation5 + $0x240] sm:$0xff]
    %v389 = vld [vmem:[#allocation5 + $0x248] sm:$0xff]
    %v390 = vld [vmem:[#allocation5 + $0x250] sm:$0xff]
    %v391 = vld [vmem:[#allocation5 + $0x258] sm:$0xff]
    %v392 = vld [vmem:[#allocation5 + $0x260] sm:$0xff]
    %v393 = vld [vmem:[#allocation5 + $0x268] sm:$0xff]
    %v394 = vld [vmem:[#allocation5 + $0x270] sm:$0xff]
    %v395 = vld [vmem:[#allocation5 + $0x278] sm:$0xff]
    %v396 = vld [vmem:[#allocation5 + $0x280] sm:$0xff]
    %v397 = vld [vmem:[#allocation5 + $0x288] sm:$0xff]
    %v398 = vld [vmem:[#allocation5 + $0x290] sm:$0xff]
    %v399 = vld [vmem:[#allocation5 + $0x298] sm:$0xff]
    %v400 = vld [vmem:[#allocation5 + $0x2a0] sm:$0xff]
    %v401 = vld [vmem:[#allocation5 + $0x2a8] sm:$0xff]
    %v402 = vld [vmem:[#allocation5 + $0x2b0] sm:$0xff]
    %v403 = vld [vmem:[#allocation5 + $0x2b8] sm:$0xff]
    %v404 = vld [vmem:[#allocation5 + $0x2c0] sm:$0xff]
    %v405 = vld [vmem:[#allocation5 + $0x2c8] sm:$0xff]
    %v406 = vld [vmem:[#allocation5 + $0x2d0] sm:$0xff]
    %v407 = vld [vmem:[#allocation5 + $0x2d8] sm:$0xff]
    %v408 = vld [vmem:[#allocation5 + $0x2e0] sm:$0xff]
    %v409 = vld [vmem:[#allocation5 + $0x2e8] sm:$0xff]
    %v410 = vld [vmem:[#allocation5 + $0x2f0] sm:$0xff]
    %v411 = vld [vmem:[#allocation5 + $0x2f8] sm:$0xff]
    %v412 = vld [vmem:[#allocation5 + $0x300] sm:$0xff]
    %v413 = vld [vmem:[#allocation5 + $0x308] sm:$0xff]
    %v414 = vld [vmem:[#allocation5 + $0x310] sm:$0xff]
    %v415 = vld [vmem:[#allocation5 + $0x318] sm:$0xff]
    %v416 = vld [vmem:[#allocation5 + $0x320] sm:$0xff]
    %v417 = vld [vmem:[#allocation5 + $0x328] sm:$0xff]
    %v418 = vld [vmem:[#allocation5 + $0x330] sm:$0xff]
    %v419 = vld [vmem:[#allocation5 + $0x338] sm:$0xff]
    %v420 = vld [vmem:[#allocation5 + $0x340] sm:$0xff]
    %v421 = vld [vmem:[#allocation5 + $0x348] sm:$0xff]
    %v422 = vld [vmem:[#allocation5 + $0x350] sm:$0xff]
    %v423 = vld [vmem:[#allocation5 + $0x358] sm:$0xff]
    %v424 = vld [vmem:[#allocation5 + $0x360] sm:$0xff]
    %v425 = vld [vmem:[#allocation5 + $0x368] sm:$0xff]
    %v426 = vld [vmem:[#allocation5 + $0x370] sm:$0xff]
    %v427 = vld [vmem:[#allocation5 + $0x378] sm:$0xff]
    %v428 = vld [vmem:[#allocation5 + $0x380] sm:$0xff]
    %v429 = vld [vmem:[#allocation5 + $0x388] sm:$0xff]
    %v430 = vld [vmem:[#allocation5 + $0x390] sm:$0xff]
    %v431 = vld [vmem:[#allocation5 + $0x398] sm:$0xff]
    %v432 = vld [vmem:[#allocation5 + $0x3a0] sm:$0xff]
    %v433 = vld [vmem:[#allocation5 + $0x3a8] sm:$0xff]
    %v434 = vld [vmem:[#allocation5 + $0x3b0] sm:$0xff]
    %v435 = vld [vmem:[#allocation5 + $0x3b8] sm:$0xff]
    %v436 = vld [vmem:[#allocation5 + $0x3c0] sm:$0xff]
    %v437 = vld [vmem:[#allocation5 + $0x3c8] sm:$0xff]
    %v438 = vld [vmem:[#allocation5 + $0x3d0] sm:$0xff]
    %v439 = vld [vmem:[#allocation5 + $0x3d8] sm:$0xff]
    %v440 = vld [vmem:[#allocation5 + $0x3e0] sm:$0xff]
    %v441 = vld [vmem:[#allocation5 + $0x3e8] sm:$0xff]
    %v442 = vld [vmem:[#allocation5 + $0x3f0] sm:$0xff]
    %v443 = vld [vmem:[#allocation5 + $0x3f8] sm:$0xff]
    %v444 = vmul.f32 %v316, 1.442695
    %v445 = vpow.pop %v444
    %v446 = vmul.f32 %v317, 1.442695
    %v447 = vpow.pop %v446
    %v448 = vmul.f32 %v318, 1.442695
    %v449 = vpow.pop %v448
    %v450 = vmul.f32 %v319, 1.442695
    %v451 = vpow.pop %v450
    %v452 = vmul.f32 %v320, 1.442695
    %v453 = vpow.pop %v452
    %v454 = vmul.f32 %v321, 1.442695
    %v455 = vpow.pop %v454
    %v456 = vmul.f32 %v322, 1.442695
    %v457 = vpow.pop %v456
    %v458 = vmul.f32 %v323, 1.442695
    %v459 = vpow.pop %v458
    %v460 = vmul.f32 %v324, 1.442695
    %v461 = vpow.pop %v460
    %v462 = vmul.f32 %v325, 1.442695
    %v463 = vpow.pop %v462
    %v464 = vmul.f32 %v326, 1.442695
    %v465 = vpow.pop %v464
    %v466 = vmul.f32 %v327, 1.442695
    %v467 = vpow.pop %v466
    %v468 = vmul.f32 %v328, 1.442695
    %v469 = vpow.pop %v468
    %v470 = vmul.f32 %v329, 1.442695
    %v471 = vpow.pop %v470
    %v472 = vmul.f32 %v330, 1.442695
    %v473 = vpow.pop %v472
    %v474 = vmul.f32 %v331, 1.442695
    %v475 = vpow.pop %v474
    %v476 = vmul.f32 %v332, 1.442695
    %v477 = vpow.pop %v476
    %v478 = vmul.f32 %v333, 1.442695
    %v479 = vpow.pop %v478
    %v480 = vmul.f32 %v334, 1.442695
    %v481 = vpow.pop %v480
    %v482 = vmul.f32 %v335, 1.442695
    %v483 = vpow.pop %v482
    %v484 = vmul.f32 %v336, 1.442695
    %v485 = vpow.pop %v484
    %v486 = vmul.f32 %v337, 1.442695
    %v487 = vpow.pop %v486
    %v488 = vmul.f32 %v338, 1.442695
    %v489 = vpow.pop %v488
    %v490 = vmul.f32 %v339, 1.442695
    %v491 = vpow.pop %v490
    %v492 = vmul.f32 %v340, 1.442695
    %v493 = vpow.pop %v492
    %v494 = vmul.f32 %v341, 1.442695
    %v495 = vpow.pop %v494
    %v496 = vmul.f32 %v342, 1.442695
    %v497 = vpow.pop %v496
    %v498 = vmul.f32 %v343, 1.442695
    %v499 = vpow.pop %v498
    %v500 = vmul.f32 %v344, 1.442695
    %v501 = vpow.pop %v500
    %v502 = vmul.f32 %v345, 1.442695
    %v503 = vpow.pop %v502
    %v504 = vmul.f32 %v346, 1.442695
    %v505 = vpow.pop %v504
    %v506 = vmul.f32 %v347, 1.442695
    %v507 = vpow.pop %v506
    %v508 = vmul.f32 %v348, 1.442695
    %v509 = vpow.pop %v508
    %v510 = vmul.f32 %v349, 1.442695
    %v511 = vpow.pop %v510
    %v512 = vmul.f32 %v350, 1.442695
    %v513 = vpow.pop %v512
    %v514 = vmul.f32 %v351, 1.442695
    %v515 = vpow.pop %v514
    %v516 = vmul.f32 %v352, 1.442695
    %v517 = vpow.pop %v516
    %v518 = vmul.f32 %v353, 1.442695
    %v519 = vpow.pop %v518
    %v520 = vmul.f32 %v354, 1.442695
    %v521 = vpow.pop %v520
    %v522 = vmul.f32 %v355, 1.442695
    %v523 = vpow.pop %v522
    %v524 = vmul.f32 %v356, 1.442695
    %v525 = vpow.pop %v524
    %v526 = vmul.f32 %v357, 1.442695
    %v527 = vpow.pop %v526
    %v528 = vmul.f32 %v358, 1.442695
    %v529 = vpow.pop %v528
    %v530 = vmul.f32 %v359, 1.442695
    %v531 = vpow.pop %v530
    %v532 = vmul.f32 %v360, 1.442695
    %v533 = vpow.pop %v532
    %v534 = vmul.f32 %v361, 1.442695
    %v535 = vpow.pop %v534
    %v536 = vmul.f32 %v362, 1.442695
    %v537 = vpow.pop %v536
    %v538 = vmul.f32 %v363, 1.442695
    %v539 = vpow.pop %v538
    %v540 = vmul.f32 %v364, 1.442695
    %v541 = vpow.pop %v540
    %v542 = vmul.f32 %v365, 1.442695
    %v543 = vpow.pop %v542
    %v544 = vmul.f32 %v366, 1.442695
    %v545 = vpow.pop %v544
    %v546 = vmul.f32 %v367, 1.442695
    %v547 = vpow.pop %v546
    %v548 = vmul.f32 %v368, 1.442695
    %v549 = vpow.pop %v548
    %v550 = vmul.f32 %v369, 1.442695
    %v551 = vpow.pop %v550
    %v552 = vmul.f32 %v370, 1.442695
    %v553 = vpow.pop %v552
    %v554 = vmul.f32 %v371, 1.442695
    %v555 = vpow.pop %v554
    %v556 = vmul.f32 %v372, 1.442695
    %v557 = vpow.pop %v556
    %v558 = vmul.f32 %v373, 1.442695
    %v559 = vpow.pop %v558
    %v560 = vmul.f32 %v374, 1.442695
    %v561 = vpow.pop %v560
    %v562 = vmul.f32 %v375, 1.442695
    %v563 = vpow.pop %v562
    %v564 = vmul.f32 %v376, 1.442695
    %v565 = vpow.pop %v564
    %v566 = vmul.f32 %v377, 1.442695
    %v567 = vpow.pop %v566
    %v568 = vmul.f32 %v378, 1.442695
    %v569 = vpow.pop %v568
    %v570 = vmul.f32 %v379, 1.442695
    %v571 = vpow.pop %v570
    %v572 = vmul.f32 %v380, 1.442695
    %v573 = vpow.pop %v572
    %v574 = vmul.f32 %v381, 1.442695
    %v575 = vpow.pop %v574
    %v576 = vmul.f32 %v382, 1.442695
    %v577 = vpow.pop %v576
    %v578 = vmul.f32 %v383, 1.442695
    %v579 = vpow.pop %v578
    %v580 = vmul.f32 %v384, 1.442695
    %v581 = vpow.pop %v580
    %v582 = vmul.f32 %v385, 1.442695
    %v583 = vpow.pop %v582
    %v584 = vmul.f32 %v386, 1.442695
    %v585 = vpow.pop %v584
    %v586 = vmul.f32 %v387, 1.442695
    %v587 = vpow.pop %v586
    %v588 = vmul.f32 %v388, 1.442695
    %v589 = vpow.pop %v588
    %v590 = vmul.f32 %v389, 1.442695
    %v591 = vpow.pop %v590
    %v592 = vmul.f32 %v390, 1.442695
    %v593 = vpow.pop %v592
    %v594 = vmul.f32 %v391, 1.442695
    %v595 = vpow.pop %v594
    %v596 = vmul.f32 %v392, 1.442695
    %v597 = vpow.pop %v596
    %v598 = vmul.f32 %v393, 1.442695
    %v599 = vpow.pop %v598
    %v600 = vmul.f32 %v394, 1.442695
    %v601 = vpow.pop %v600
    %v602 = vmul.f32 %v395, 1.442695
    %v603 = vpow.pop %v602
    %v604 = vmul.f32 %v396, 1.442695
    %v605 = vpow.pop %v604
    %v606 = vmul.f32 %v397, 1.442695
    %v607 = vpow.pop %v606
    %v608 = vmul.f32 %v398, 1.442695
    %v609 = vpow.pop %v608
    %v610 = vmul.f32 %v399, 1.442695
    %v611 = vpow.pop %v610
    %v612 = vmul.f32 %v400, 1.442695
    %v613 = vpow.pop %v612
    %v614 = vmul.f32 %v401, 1.442695
    %v615 = vpow.pop %v614
    %v616 = vmul.f32 %v402, 1.442695
    %v617 = vpow.pop %v616
    %v618 = vmul.f32 %v403, 1.442695
    %v619 = vpow.pop %v618
    %v620 = vmul.f32 %v404, 1.442695
    %v621 = vpow.pop %v620
    %v622 = vmul.f32 %v405, 1.442695
    %v623 = vpow.pop %v622
    %v624 = vmul.f32 %v406, 1.442695
    %v625 = vpow.pop %v624
    %v626 = vmul.f32 %v407, 1.442695
    %v627 = vpow.pop %v626
    %v628 = vmul.f32 %v408, 1.442695
    %v629 = vpow.pop %v628
    %v630 = vmul.f32 %v409, 1.442695
    %v631 = vpow.pop %v630
    %v632 = vmul.f32 %v410, 1.442695
    %v633 = vpow.pop %v632
    %v634 = vmul.f32 %v411, 1.442695
    %v635 = vpow.pop %v634
    %v636 = vmul.f32 %v412, 1.442695
    %v637 = vpow.pop %v636
    %v638 = vmul.f32 %v413, 1.442695
    %v639 = vpow.pop %v638
    %v640 = vmul.f32 %v414, 1.442695
    %v641 = vpow.pop %v640
    %v642 = vmul.f32 %v415, 1.442695
    %v643 = vpow.pop %v642
    %v644 = vmul.f32 %v416, 1.442695
    %v645 = vpow.pop %v644
    %v646 = vmul.f32 %v417, 1.442695
    %v647 = vpow.pop %v646
    %v648 = vmul.f32 %v418, 1.442695
    %v649 = vpow.pop %v648
    %v650 = vmul.f32 %v419, 1.442695
    %v651 = vpow.pop %v650
    %v652 = vmul.f32 %v420, 1.442695
    %v653 = vpow.pop %v652
    %v654 = vmul.f32 %v421, 1.442695
    %v655 = vpow.pop %v654
    %v656 = vmul.f32 %v422, 1.442695
    %v657 = vpow.pop %v656
    %v658 = vmul.f32 %v423, 1.442695
    %v659 = vpow.pop %v658
    %v660 = vmul.f32 %v424, 1.442695
    %v661 = vpow.pop %v660
    %v662 = vmul.f32 %v425, 1.442695
    %v663 = vpow.pop %v662
    %v664 = vmul.f32 %v426, 1.442695
    %v665 = vpow.pop %v664
    %v666 = vmul.f32 %v427, 1.442695
    %v667 = vpow.pop %v666
    %v668 = vmul.f32 %v428, 1.442695
    %v669 = vpow.pop %v668
    %v670 = vmul.f32 %v429, 1.442695
    %v671 = vpow.pop %v670
    %v672 = vmul.f32 %v430, 1.442695
    %v673 = vpow.pop %v672
    %v674 = vmul.f32 %v431, 1.442695
    %v675 = vpow.pop %v674
    %v676 = vmul.f32 %v432, 1.442695
    %v677 = vpow.pop %v676
    %v678 = vmul.f32 %v433, 1.442695
    %v679 = vpow.pop %v678
    %v680 = vmul.f32 %v434, 1.442695
    %v681 = vpow.pop %v680
    %v682 = vmul.f32 %v435, 1.442695
    %v683 = vpow.pop %v682
    %v684 = vmul.f32 %v436, 1.442695
    %v685 = vpow.pop %v684
    %v686 = vmul.f32 %v437, 1.442695
    %v687 = vpow.pop %v686
    %v688 = vmul.f32 %v438, 1.442695
    %v689 = vpow.pop %v688
    %v690 = vmul.f32 %v439, 1.442695
    %v691 = vpow.pop %v690
    %v692 = vmul.f32 %v440, 1.442695
    %v693 = vpow.pop %v692
    %v694 = vmul.f32 %v441, 1.442695
    %v695 = vpow.pop %v694
    %v696 = vmul.f32 %v442, 1.442695
    %v697 = vpow.pop %v696
    %v698 = vmul.f32 %v443, 1.442695
    %v699 = vpow.pop %v698
    %v700 = vmul.f32 %v188, %v188
    %v701 = vmul.f32 %v189, %v189
    %v702 = vmul.f32 %v190, %v190
    %v703 = vmul.f32 %v191, %v191
    %v704 = vmul.f32 %v192, %v192
    %v705 = vmul.f32 %v193, %v193
    %v706 = vmul.f32 %v194, %v194
    %v707 = vmul.f32 %v195, %v195
    %v708 = vmul.f32 %v196, %v196
    %v709 = vmul.f32 %v197, %v197
    %v710 = vmul.f32 %v198, %v198
    %v711 = vmul.f32 %v199, %v199
    %v712 = vmul.f32 %v200, %v200
    %v713 = vmul.f32 %v201, %v201
    %v714 = vmul.f32 %v202, %v202
    %v715 = vmul.f32 %v203, %v203
    %v716 = vmul.f32 %v204, %v204
    %v717 = vmul.f32 %v205, %v205
    %v718 = vmul.f32 %v206, %v206
    %v719 = vmul.f32 %v207, %v207
    %v720 = vmul.f32 %v208, %v208
    %v721 = vmul.f32 %v209, %v209
    %v722 = vmul.f32 %v210, %v210
    %v723 = vmul.f32 %v211, %v211
    %v724 = vmul.f32 %v212, %v212
    %v725 = vmul.f32 %v213, %v213
    %v726 = vmul.f32 %v214, %v214
    %v727 = vmul.f32 %v215, %v215
    %v728 = vmul.f32 %v216, %v216
    %v729 = vmul.f32 %v217, %v217
    %v730 = vmul.f32 %v218, %v218
    %v731 = vmul.f32 %v219, %v219
    %v732 = vmul.f32 %v220, %v220
    %v733 = vmul.f32 %v221, %v221
    %v734 = vmul.f32 %v222, %v222
    %v735 = vmul.f32 %v223, %v223
    %v736 = vmul.f32 %v224, %v224
    %v737 = vmul.f32 %v225, %v225
    %v738 = vmul.f32 %v226, %v226
    %v739 = vmul.f32 %v227, %v227
    %v740 = vmul.f32 %v228, %v228
    %v741 = vmul.f32 %v229, %v229
    %v742 = vmul.f32 %v230, %v230
    %v743 = vmul.f32 %v231, %v231
    %v744 = vmul.f32 %v232, %v232
    %v745 = vmul.f32 %v233, %v233
    %v746 = vmul.f32 %v234, %v234
    %v747 = vmul.f32 %v235, %v235
    %v748 = vmul.f32 %v236, %v236
    %v749 = vmul.f32 %v237, %v237
    %v750 = vmul.f32 %v238, %v238
    %v751 = vmul.f32 %v239, %v239
    %v752 = vmul.f32 %v240, %v240
    %v753 = vmul.f32 %v241, %v241
    %v754 = vmul.f32 %v242, %v242
    %v755 = vmul.f32 %v243, %v243
    %v756 = vmul.f32 %v244, %v244
    %v757 = vmul.f32 %v245, %v245
    %v758 = vmul.f32 %v246, %v246
    %v759 = vmul.f32 %v247, %v247
    %v760 = vmul.f32 %v248, %v248
    %v761 = vmul.f32 %v249, %v249
    %v762 = vmul.f32 %v250, %v250
    %v763 = vmul.f32 %v251, %v251
    %v764 = vmul.f32 %v252, %v252
    %v765 = vmul.f32 %v253, %v253
    %v766 = vmul.f32 %v254, %v254
    %v767 = vmul.f32 %v255, %v255
    %v768 = vmul.f32 %v256, %v256
    %v769 = vmul.f32 %v257, %v257
    %v770 = vmul.f32 %v258, %v258
    %v771 = vmul.f32 %v259, %v259
    %v772 = vmul.f32 %v260, %v260
    %v773 = vmul.f32 %v261, %v261
    %v774 = vmul.f32 %v262, %v262
    %v775 = vmul.f32 %v263, %v263
    %v776 = vmul.f32 %v264, %v264
    %v777 = vmul.f32 %v265, %v265
    %v778 = vmul.f32 %v266, %v266
    %v779 = vmul.f32 %v267, %v267
    %v780 = vmul.f32 %v268, %v268
    %v781 = vmul.f32 %v269, %v269
    %v782 = vmul.f32 %v270, %v270
    %v783 = vmul.f32 %v271, %v271
    %v784 = vmul.f32 %v272, %v272
    %v785 = vmul.f32 %v273, %v273
    %v786 = vmul.f32 %v274, %v274
    %v787 = vmul.f32 %v275, %v275
    %v788 = vmul.f32 %v276, %v276
    %v789 = vmul.f32 %v277, %v277
    %v790 = vmul.f32 %v278, %v278
    %v791 = vmul.f32 %v279, %v279
    %v792 = vmul.f32 %v280, %v280
    %v793 = vmul.f32 %v281, %v281
    %v794 = vmul.f32 %v282, %v282
    %v795 = vmul.f32 %v283, %v283
    %v796 = vmul.f32 %v284, %v284
    %v797 = vmul.f32 %v285, %v285
    %v798 = vmul.f32 %v286, %v286
    %v799 = vmul.f32 %v287, %v287
    %v800 = vmul.f32 %v288, %v288
    %v801 = vmul.f32 %v289, %v289
    %v802 = vmul.f32 %v290, %v290
    %v803 = vmul.f32 %v291, %v291
    %v804 = vmul.f32 %v292, %v292
    %v805 = vmul.f32 %v293, %v293
    %v806 = vmul.f32 %v294, %v294
    %v807 = vmul.f32 %v295, %v295
    %v808 = vmul.f32 %v296, %v296
    %v809 = vmul.f32 %v297, %v297
    %v810 = vmul.f32 %v298, %v298
    %v811 = vmul.f32 %v299, %v299
    %v812 = vmul.f32 %v300, %v300
    %v813 = vmul.f32 %v301, %v301
    %v814 = vmul.f32 %v302, %v302
    %v815 = vmul.f32 %v303, %v303
    %v816 = vmul.f32 %v304, %v304
    %v817 = vmul.f32 %v305, %v305
    %v818 = vmul.f32 %v306, %v306
    %v819 = vmul.f32 %v307, %v307
    %v820 = vmul.f32 %v308, %v308
    %v821 = vmul.f32 %v309, %v309
    %v822 = vmul.f32 %v310, %v310
    %v823 = vmul.f32 %v311, %v311
    %v824 = vmul.f32 %v312, %v312
    %v825 = vmul.f32 %v313, %v313
    %v826 = vmul.f32 %v314, %v314
    %v827 = vmul.f32 %v315, %v315
    %v828 = vmul.f32 %v445, %v700
    %v829 = vmul.f32 %v447, %v701
    %v830 = vmul.f32 %v449, %v702
    %v831 = vmul.f32 %v451, %v703
    %v832 = vmul.f32 %v453, %v704
    %v833 = vmul.f32 %v455, %v705
    %v834 = vmul.f32 %v457, %v706
    %v835 = vmul.f32 %v459, %v707
    %v836 = vmul.f32 %v461, %v708
    %v837 = vmul.f32 %v463, %v709
    %v838 = vmul.f32 %v465, %v710
    %v839 = vmul.f32 %v467, %v711
    %v840 = vmul.f32 %v469, %v712
    %v841 = vmul.f32 %v471, %v713
    %v842 = vmul.f32 %v473, %v714
    %v843 = vmul.f32 %v475, %v715
    %v844 = vmul.f32 %v477, %v716
    %v845 = vmul.f32 %v479, %v717
    %v846 = vmul.f32 %v481, %v718
    %v847 = vmul.f32 %v483, %v719
    %v848 = vmul.f32 %v485, %v720
    %v849 = vmul.f32 %v487, %v721
    %v850 = vmul.f32 %v489, %v722
    %v851 = vmul.f32 %v491, %v723
    %v852 = vmul.f32 %v493, %v724
    %v853 = vmul.f32 %v495, %v725
    %v854 = vmul.f32 %v497, %v726
    %v855 = vmul.f32 %v499, %v727
    %v856 = vmul.f32 %v501, %v728
    %v857 = vmul.f32 %v503, %v729
    %v858 = vmul.f32 %v505, %v730
    %v859 = vmul.f32 %v507, %v731
    %v860 = vmul.f32 %v509, %v732
    %v861 = vmul.f32 %v511, %v733
    %v862 = vmul.f32 %v513, %v734
    %v863 = vmul.f32 %v515, %v735
    %v864 = vmul.f32 %v517, %v736
    %v865 = vmul.f32 %v519, %v737
    %v866 = vmul.f32 %v521, %v738
    %v867 = vmul.f32 %v523, %v739
    %v868 = vmul.f32 %v525, %v740
    %v869 = vmul.f32 %v527, %v741
    %v870 = vmul.f32 %v529, %v742
    %v871 = vmul.f32 %v531, %v743
    %v872 = vmul.f32 %v533, %v744
    %v873 = vmul.f32 %v535, %v745
    %v874 = vmul.f32 %v537, %v746
    %v875 = vmul.f32 %v539, %v747
    %v876 = vmul.f32 %v541, %v748
    %v877 = vmul.f32 %v543, %v749
    %v878 = vmul.f32 %v545, %v750
    %v879 = vmul.f32 %v547, %v751
    %v880 = vmul.f32 %v549, %v752
    %v881 = vmul.f32 %v551, %v753
    %v882 = vmul.f32 %v553, %v754
    %v883 = vmul.f32 %v555, %v755
    %v884 = vmul.f32 %v557, %v756
    %v885 = vmul.f32 %v559, %v757
    %v886 = vmul.f32 %v561, %v758
    %v887 = vmul.f32 %v563, %v759
    %v888 = vmul.f32 %v565, %v760
    %v889 = vmul.f32 %v567, %v761
    %v890 = vmul.f32 %v569, %v762
    %v891 = vmul.f32 %v571, %v763
    %v892 = vmul.f32 %v573, %v764
    %v893 = vmul.f32 %v575, %v765
    %v894 = vmul.f32 %v577, %v766
    %v895 = vmul.f32 %v579, %v767
    %v896 = vmul.f32 %v581, %v768
    %v897 = vmul.f32 %v583, %v769
    %v898 = vmul.f32 %v585, %v770
    %v899 = vmul.f32 %v587, %v771
    %v900 = vmul.f32 %v589, %v772
    %v901 = vmul.f32 %v591, %v773
    %v902 = vmul.f32 %v593, %v774
    %v903 = vmul.f32 %v595, %v775
    %v904 = vmul.f32 %v597, %v776
    %v905 = vmul.f32 %v599, %v777
    %v906 = vmul.f32 %v601, %v778
    %v907 = vmul.f32 %v603, %v779
    %v908 = vmul.f32 %v605, %v780
    %v909 = vmul.f32 %v607, %v781
    %v910 = vmul.f32 %v609, %v782
    %v911 = vmul.f32 %v611, %v783
    %v912 = vmul.f32 %v613, %v784
    %v913 = vmul.f32 %v615, %v785
    %v914 = vmul.f32 %v617, %v786
    %v915 = vmul.f32 %v619, %v787
    %v916 = vmul.f32 %v621, %v788
    %v917 = vmul.f32 %v623, %v789
    %v918 = vmul.f32 %v625, %v790
    %v919 = vmul.f32 %v627, %v791
    %v920 = vmul.f32 %v629, %v792
    %v921 = vmul.f32 %v631, %v793
    %v922 = vmul.f32 %v633, %v794
    %v923 = vmul.f32 %v635, %v795
    %v924 = vmul.f32 %v637, %v796
    %v925 = vmul.f32 %v639, %v797
    %v926 = vmul.f32 %v641, %v798
    %v927 = vmul.f32 %v643, %v799
    %v928 = vmul.f32 %v645, %v800
    %v929 = vmul.f32 %v647, %v801
    %v930 = vmul.f32 %v649, %v802
    %v931 = vmul.f32 %v651, %v803
    %v932 = vmul.f32 %v653, %v804
    %v933 = vmul.f32 %v655, %v805
    %v934 = vmul.f32 %v657, %v806
    %v935 = vmul.f32 %v659, %v807
    %v936 = vmul.f32 %v661, %v808
    %v937 = vmul.f32 %v663, %v809
    %v938 = vmul.f32 %v665, %v810
    %v939 = vmul.f32 %v667, %v811
    %v940 = vmul.f32 %v669, %v812
    %v941 = vmul.f32 %v671, %v813
    %v942 = vmul.f32 %v673, %v814
    %v943 = vmul.f32 %v675, %v815
    %v944 = vmul.f32 %v677, %v816
    %v945 = vmul.f32 %v679, %v817
    %v946 = vmul.f32 %v681, %v818
    %v947 = vmul.f32 %v683, %v819
    %v948 = vmul.f32 %v685, %v820
    %v949 = vmul.f32 %v687, %v821
    %v950 = vmul.f32 %v689, %v822
    %v951 = vmul.f32 %v691, %v823
    %v952 = vmul.f32 %v693, %v824
    %v953 = vmul.f32 %v695, %v825
    %v954 = vmul.f32 %v697, %v826
    %v955 = vmul.f32 %v699, %v827
    %v956 = vld [vmem:[#allocation7] sm:$0xff]
    %v957 = vld [vmem:[#allocation7 + $0x8] sm:$0xff]
    %v958 = vld [vmem:[#allocation7 + $0x10] sm:$0xff]
    %v959 = vld [vmem:[#allocation7 + $0x18] sm:$0xff]
    %v960 = vadd.f32 %v828, %v832
    %v961 = vadd.f32 %v960, %v836
    %v962 = vadd.f32 %v961, %v840
    %v963 = vadd.f32 %v962, %v844
    %v964 = vadd.f32 %v963, %v848
    %v965 = vadd.f32 %v964, %v852
    %v966 = vadd.f32 %v965, %v856
    %v967 = vadd.f32 %v966, %v860
    %v968 = vadd.f32 %v967, %v864
    %v969 = vadd.f32 %v968, %v868
    %v970 = vadd.f32 %v969, %v872
    %v971 = vadd.f32 %v970, %v876
    %v972 = vadd.f32 %v971, %v880
    %v973 = vadd.f32 %v972, %v884
    %v974 = vadd.f32 %v973, %v888
    %v975 = vadd.f32 %v974, %v892
    %v976 = vadd.f32 %v975, %v896
    %v977 = vadd.f32 %v976, %v900
    %v978 = vadd.f32 %v977, %v904
    %v979 = vadd.f32 %v978, %v908
    %v980 = vadd.f32 %v979, %v912
    %v981 = vadd.f32 %v980, %v916
    %v982 = vadd.f32 %v981, %v920
    %v983 = vadd.f32 %v982, %v924
    %v984 = vadd.f32 %v983, %v928
    %v985 = vadd.f32 %v984, %v932
    %v986 = vadd.f32 %v985, %v936
    %v987 = vadd.f32 %v986, %v940
    %v988 = vadd.f32 %v987, %v944
    %v989 = vadd.f32 %v988, %v948
    %v990 = vadd.f32 %v989, %v952
    %v991 = vadd.f32 %v829, %v833
    %v992 = vadd.f32 %v991, %v837
    %v993 = vadd.f32 %v992, %v841
    %v994 = vadd.f32 %v993, %v845
    %v995 = vadd.f32 %v994, %v849
    %v996 = vadd.f32 %v995, %v853
    %v997 = vadd.f32 %v996, %v857
    %v998 = vadd.f32 %v997, %v861
    %v999 = vadd.f32 %v998, %v865
    %v1000 = vadd.f32 %v999, %v869
    %v1001 = vadd.f32 %v1000, %v873
    %v1002 = vadd.f32 %v1001, %v877
    %v1003 = vadd.f32 %v1002, %v881
    %v1004 = vadd.f32 %v1003, %v885
    %v1005 = vadd.f32 %v1004, %v889
    %v1006 = vadd.f32 %v1005, %v893
    %v1007 = vadd.f32 %v1006, %v897
    %v1008 = vadd.f32 %v1007, %v901
    %v1009 = vadd.f32 %v1008, %v905
    %v1010 = vadd.f32 %v1009, %v909
    %v1011 = vadd.f32 %v1010, %v913
    %v1012 = vadd.f32 %v1011, %v917
    %v1013 = vadd.f32 %v1012, %v921
    %v1014 = vadd.f32 %v1013, %v925
    %v1015 = vadd.f32 %v1014, %v929
    %v1016 = vadd.f32 %v1015, %v933
    %v1017 = vadd.f32 %v1016, %v937
    %v1018 = vadd.f32 %v1017, %v941
    %v1019 = vadd.f32 %v1018, %v945
    %v1020 = vadd.f32 %v1019, %v949
    %v1021 = vadd.f32 %v1020, %v953
    %v1022 = vadd.f32 %v830, %v834
    %v1023 = vadd.f32 %v1022, %v838
    %v1024 = vadd.f32 %v1023, %v842
    %v1025 = vadd.f32 %v1024, %v846
    %v1026 = vadd.f32 %v1025, %v850
    %v1027 = vadd.f32 %v1026, %v854
    %v1028 = vadd.f32 %v1027, %v858
    %v1029 = vadd.f32 %v1028, %v862
    %v1030 = vadd.f32 %v1029, %v866
    %v1031 = vadd.f32 %v1030, %v870
    %v1032 = vadd.f32 %v1031, %v874
    %v1033 = vadd.f32 %v1032, %v878
    %v1034 = vadd.f32 %v1033, %v882
    %v1035 = vadd.f32 %v1034, %v886
    %v1036 = vadd.f32 %v1035, %v890
    %v1037 = vadd.f32 %v1036, %v894
    %v1038 = vadd.f32 %v1037, %v898
    %v1039 = vadd.f32 %v1038, %v902
    %v1040 = vadd.f32 %v1039, %v906
    %v1041 = vadd.f32 %v1040, %v910
    %v1042 = vadd.f32 %v1041, %v914
    %v1043 = vadd.f32 %v1042, %v918
    %v1044 = vadd.f32 %v1043, %v922
    %v1045 = vadd.f32 %v1044, %v926
    %v1046 = vadd.f32 %v1045, %v930
    %v1047 = vadd.f32 %v1046, %v934
    %v1048 = vadd.f32 %v1047, %v938
    %v1049 = vadd.f32 %v1048, %v942
    %v1050 = vadd.f32 %v1049, %v946
    %v1051 = vadd.f32 %v1050, %v950
    %v1052 = vadd.f32 %v1051, %v954
    %v1053 = vadd.f32 %v831, %v835
    %v1054 = vadd.f32 %v1053, %v839
    %v1055 = vadd.f32 %v1054, %v843
    %v1056 = vadd.f32 %v1055, %v847
    %v1057 = vadd.f32 %v1056, %v851
    %v1058 = vadd.f32 %v1057, %v855
    %v1059 = vadd.f32 %v1058, %v859
    %v1060 = vadd.f32 %v1059, %v863
    %v1061 = vadd.f32 %v1060, %v867
    %v1062 = vadd.f32 %v1061, %v871
    %v1063 = vadd.f32 %v1062, %v875
    %v1064 = vadd.f32 %v1063, %v879
    %v1065 = vadd.f32 %v1064, %v883
    %v1066 = vadd.f32 %v1065, %v887
    %v1067 = vadd.f32 %v1066, %v891
    %v1068 = vadd.f32 %v1067, %v895
    %v1069 = vadd.f32 %v1068, %v899
    %v1070 = vadd.f32 %v1069, %v903
    %v1071 = vadd.f32 %v1070, %v907
    %v1072 = vadd.f32 %v1071, %v911
    %v1073 = vadd.f32 %v1072, %v915
    %v1074 = vadd.f32 %v1073, %v919
    %v1075 = vadd.f32 %v1074, %v923
    %v1076 = vadd.f32 %v1075, %v927
    %v1077 = vadd.f32 %v1076, %v931
    %v1078 = vadd.f32 %v1077, %v935
    %v1079 = vadd.f32 %v1078, %v939
    %v1080 = vadd.f32 %v1079, %v943
    %v1081 = vadd.f32 %v1080, %v947
    %v1082 = vadd.f32 %v1081, %v951
    %v1083 = vadd.f32 %v1082, %v955
    %v1084 = vadd.f32 %v956, %v990
    %v1085 = vadd.f32 %v957, %v1021
    %v1086 = vadd.f32 %v958, %v1052
    %v1087 = vadd.f32 %v959, %v1083
    %1088 = vst [vmem:[#allocation7] sm:$0xff] %v1084
    %1089 = vst [vmem:[#allocation7 + $0x8] sm:$0xff] %v1085
    %1090 = vst [vmem:[#allocation7 + $0x10] sm:$0xff] %v1086
    %1091 = vst [vmem:[#allocation7 + $0x18] sm:$0xff] %v1087
    // Predicated region
    $region22: #{tpu_custom_call.1} parent=1 // pred_check
      _
    $region23: #{tpu_custom_call.1} parent=1 // pred_check_branch
      %1093 = sbr.rel (0) target = $region25
    $region24: #{tpu_custom_call.1} parent=1 // pred_region
      %s1095 = ssub.s32 512, 512
      %1096 = vsyncadd [#allocation4], %s1095
      %s1097 = sshll.u32 [#allocation7], 4
      %s1098 = int_to_ptr.vmem [resolvable:$true] %s1097
      %1103 = dma.vmem_to_hbm [thread:$0]  %s1098, 512, %s2, [#allocation4], 128, 128, 8
    $region25: #{tpu_custom_call.1} parent=1 // pred_fallthru
      _
    // Predicated region
    $region26: #{tpu_custom_call.1} parent=1 // pred_check
      _
    $region27: #{tpu_custom_call.1} parent=1 // pred_check_branch
      %1105 = sbr.rel (0) target = $region29
    $region28: #{tpu_custom_call.1} parent=1 // pred_region
      %1106 = dma.done [#allocation4], 512
    $region29: #{tpu_custom_call.1} parent=1 // pred_fallthru
      _
    %1107 = vsyncpa [#allocation3], 1
    %1108 = vsyncpa [#allocation6], 1
    %1109 = vsyncpa [#allocation4], 1

</llo_original>
